<compile_context>
chip_gen: v6e
topology: v6e:2x2x1
jax: 0.10.0
libtpu: 0.0.40
codegen_flags: <defaults>
</compile_context>

<pallas_src>
import jax
import jax.numpy as jnp
from jax import lax
from jax.experimental import pallas as pl
from jax.experimental.pallas import tpu as pltpu

LANES = 128      # max samples per problem (lane axis)
SUBLANES = 8     # independent problems packed per grid block (sublane axis)


def _cox_loss_kernel(slab_ref, out_ref):
    # slab_ref: (4, SUBLANES, LANES) f32. slab[0]=log_hz, [1]=event,
    #           [2]=time, [3]=valid (1 real sample / 0 padding).
    # out_ref:  (SUBLANES, LANES) f32; per-problem loss broadcast across lanes.
    lh = slab_ref[0]                                                  # (S, L)
    ev = slab_ref[1]                                                  # (S, L)
    t = slab_ref[2]                                                   # (S, L)
    valid = slab_ref[3] > 0.0                                         # (S, L)

    # Numerically stable exp: per-problem max over valid samples.
    m = jnp.max(jnp.where(valid, lh, -1e30), axis=-1, keepdims=True)  # (S, 1)
    e = jnp.where(valid, jnp.exp(lh - m), 0.0)                        # (S, L)

    # Sort-free risk-set denominator, one problem (sublane row) at a time:
    #   denom[r, i] = sum_j [t[r, j] >= t[r, i]] * e[r, j]
    # Built as a (L, L) compare/select with j on sublanes, i on lanes, then a
    # sublane reduction -> (1, L) already lane-aligned with lh. Static unroll.
    row_ids = lax.broadcasted_iota(jnp.int32, (SUBLANES, LANES), 0)
    denom = jnp.zeros((SUBLANES, LANES), jnp.float32)
    for r in range(SUBLANES):
        t_r = t[r:r + 1, :]                                           # (1, L)
        e_r = e[r:r + 1, :]                                           # (1, L)
        t_i = jnp.broadcast_to(t_r, (LANES, LANES))                   # [j,i]=t_i
        t_j = t_i.T                                                   # [j,i]=t_j
        e_j = jnp.broadcast_to(e_r, (LANES, LANES)).T                 # [j,i]=e_j
        risk = jnp.where(t_j >= t_i, e_j, 0.0)                        # (L, L)
        d_r = jnp.sum(risk, axis=0, keepdims=True)                    # (1, L)
        denom = jnp.where(row_ids == r,
                          jnp.broadcast_to(d_r, (SUBLANES, LANES)), denom)

    # Padded lanes / dummy problems kept finite (masked out below anyway).
    denom = jnp.where(valid, denom, 1.0)
    log_den = jnp.log(denom) + m                                      # (S, L)
    pll = jnp.where(ev > 0.0, lh - log_den, 0.0)                      # (S, L)

    # 'mean' over event==1 samples, negated; 0 when a problem has no events.
    n_ev = jnp.sum(jnp.where(valid, ev, 0.0), axis=-1, keepdims=True)  # (S,1)
    total = jnp.sum(pll, axis=-1, keepdims=True)                       # (S,1)
    loss = jnp.where(n_ev > 0.0, -total / jnp.maximum(n_ev, 1.0), 0.0)
    out_ref[...] = jnp.broadcast_to(loss, out_ref.shape)


def cox_neg_partial_log_likelihood_batched(log_hz, event, time):
    """B independent Cox losses (one per row) in a single pallas_call.

    log_hz/event/time: (B, N) with N <= 128. Returns (B,) f32 losses, each
    matching TorchSurvCoxLoss(reduction='mean') for that row when its event
    times are unique (no-ties path; Breslow risk sets for ties)."""
    log_hz = jnp.asarray(log_hz, jnp.float32)
    event = jnp.asarray(event, jnp.float32)
    time = jnp.asarray(time, jnp.float32)
    B, n = log_hz.shape
    assert n <= LANES, "kernel supports up to 128 samples per problem"

    bp = ((B + SUBLANES - 1) // SUBLANES) * SUBLANES
    valid = jnp.ones((B, n), jnp.float32)
    # single slab: one stack + one pad, one input DMA stream
    slab = jnp.stack([log_hz, event, time, valid])                # (4, B, n)
    slab = jnp.pad(slab, ((0, 0), (0, bp - B), (0, LANES - n)))   # (4, bp, L)

    out = pl.pallas_call(
        _cox_loss_kernel,
        out_shape=jax.ShapeDtypeStruct((bp, LANES), jnp.float32),
        grid_spec=pltpu.PrefetchScalarGridSpec(
            num_scalar_prefetch=0,
            grid=(bp // SUBLANES,),
            in_specs=[pl.BlockSpec((4, SUBLANES, LANES), lambda b: (0, b, 0))],
            out_specs=pl.BlockSpec((SUBLANES, LANES), lambda b: (b, 0)),
        ),
        compiler_params=pltpu.CompilerParams(
            dimension_semantics=("parallel",)),
    )(slab)
    return out[:B, 0]


def cox_neg_partial_log_likelihood(log_hz, event, time):
    """TorchSurvCoxLoss(reduction='mean').forward for 1-D inputs.

    Exact for unique event times (the module's no-ties path); returns 0 when
    there are no events. TODO(synk): tied event times fall back to Breslow
    risk sets here, not Efron's correction."""
    return cox_neg_partial_log_likelihood_batched(
        log_hz[None, :], event[None, :], time[None, :])[0]


def _reference_loss(log_hz, event, time):
    """Pure-JAX reference: sorted reverse log-cumsum-exp (no-ties path)."""
    idx = jnp.argsort(time)
    lh = log_hz[idx].astype(jnp.float32)
    ev = event[idx].astype(jnp.float32)
    m = jnp.max(lh)
    ld = jnp.log(jnp.cumsum(jnp.exp(lh[::-1] - m))[::-1]) + m
    pll = lh - ld
    n_ev = jnp.sum(ev)
    tot = jnp.sum(jnp.where(ev > 0, pll, 0.0))
    return jnp.where(n_ev > 0, -tot / jnp.maximum(n_ev, 1.0), 0.0)


if __name__ == "__main__":
    key = jax.random.PRNGKey(0)
    k1, k2, k3, k4, k5, k6 = jax.random.split(key, 6)

    # ---- single problem (module semantics): N = 8 survival samples ----
    N = 8
    log_hz = jax.random.normal(k1, (N,), dtype=jnp.float32)
    # ensure at least one event; continuous random times -> unique (no ties)
    event = (jax.random.uniform(k2, (N,)) > 0.4).astype(jnp.int32)
    event = event.at[0].set(1)
    time = jax.random.uniform(k3, (N,), minval=0.1, maxval=10.0,
                              dtype=jnp.float32)

    loss = jax.block_until_ready(
        cox_neg_partial_log_likelihood(log_hz, event, time))
    ref = _reference_loss(log_hz, event, time)
    assert jnp.isfinite(loss), "kernel produced non-finite loss"
    assert jnp.allclose(loss, ref, atol=1e-5, rtol=1e-5), (loss, ref)

    # ---- batched: 5 independent problems x 16 samples, ONE pallas_call ----
    B, N2 = 5, 16
    lh_b = jax.random.normal(k4, (B, N2), dtype=jnp.float32)
    ev_b = (jax.random.uniform(k5, (B, N2)) > 0.4).astype(jnp.int32)
    ev_b = ev_b.at[:, 0].set(1)
    t_b = jax.random.uniform(k6, (B, N2), minval=0.1, maxval=10.0,
                             dtype=jnp.float32)

    losses = jax.block_until_ready(
        cox_neg_partial_log_likelihood_batched(lh_b, ev_b, t_b))
    refs = jnp.stack([_reference_loss(lh_b[i], ev_b[i], t_b[i])
                      for i in range(B)])
    assert bool(jnp.all(jnp.isfinite(losses)))
    assert jnp.allclose(losses, refs, atol=1e-5, rtol=1e-5), (losses, refs)

    print("KERNEL_OK")
</pallas_src>

<mosaic_0001>
module attributes {stable_mosaic.version = 11 : i64} {
  func.func @_cox_loss_kernel(%arg0: i32, %arg1: memref<4x8x128xf32, #tpu.memory_space<vmem>>, %arg2: memref<8x128xf32, #tpu.memory_space<vmem>>) attributes {dimension_semantics = [#tpu.dimension_semantics<parallel>], iteration_bounds = array<i64: 1>, scalar_prefetch = 0 : i64, scratch_operands = 0 : i64, tpu.core_type = #tpu.core_type<tc>, window_params = [{transform_indices = @transform_0, window_bounds = array<i64: 4, 8, 128>}, {transform_indices = @transform_1, window_bounds = array<i64: 8, 128>}]} {
    %c0 = arith.constant 0 : index
    %c0_0 = arith.constant 0 : index
    %c0_1 = arith.constant 0 : index
    %0 = vector.load %arg1[%c0, %c0_0, %c0_1] : memref<4x8x128xf32, #tpu.memory_space<vmem>>, vector<1x8x128xf32>
    %1 = vector.shape_cast %0 : vector<1x8x128xf32> to vector<8x128xf32>
    %c1 = arith.constant 1 : index
    %c0_2 = arith.constant 0 : index
    %c0_3 = arith.constant 0 : index
    %2 = vector.load %arg1[%c1, %c0_2, %c0_3] : memref<4x8x128xf32, #tpu.memory_space<vmem>>, vector<1x8x128xf32>
    %3 = vector.shape_cast %2 : vector<1x8x128xf32> to vector<8x128xf32>
    %c2 = arith.constant 2 : index
    %c0_4 = arith.constant 0 : index
    %c0_5 = arith.constant 0 : index
    %4 = vector.load %arg1[%c2, %c0_4, %c0_5] : memref<4x8x128xf32, #tpu.memory_space<vmem>>, vector<1x8x128xf32>
    %5 = vector.shape_cast %4 : vector<1x8x128xf32> to vector<8x128xf32>
    %c3 = arith.constant 3 : index
    %c0_6 = arith.constant 0 : index
    %c0_7 = arith.constant 0 : index
    %6 = vector.load %arg1[%c3, %c0_6, %c0_7] : memref<4x8x128xf32, #tpu.memory_space<vmem>>, vector<1x8x128xf32>
    %7 = vector.shape_cast %6 : vector<1x8x128xf32> to vector<8x128xf32>
    %cst = arith.constant 0.000000e+00 : f32
    %8 = vector.broadcast %cst : f32 to vector<8x128xf32>
    %9 = arith.cmpf ogt, %7, %8 : vector<8x128xf32>
    %cst_8 = arith.constant -1.000000e+30 : f32
    %10 = vector.broadcast %cst_8 : f32 to vector<8x128xf32>
    %11 = arith.select %9, %1, %10 : vector<8x128xi1>, vector<8x128xf32>
    %cst_9 = arith.constant dense<0xFF800000> : vector<8xf32>
    %12 = vector.multi_reduction <maximumf>, %11, %cst_9 [1] : vector<8x128xf32> to vector<8xf32>
    %13 = vector.shape_cast %12 : vector<8xf32> to vector<8x1xf32>
    %14 = vector.broadcast %13 : vector<8x1xf32> to vector<8x128xf32>
    %15 = arith.subf %1, %14 : vector<8x128xf32>
    %16 = math.exp %15 : vector<8x128xf32>
    %cst_10 = arith.constant 0.000000e+00 : f32
    %17 = vector.broadcast %cst_10 : f32 to vector<8x128xf32>
    %18 = arith.select %9, %16, %17 : vector<8x128xi1>, vector<8x128xf32>
    %19 = tpu.iota {dimensions = array<i32: 0>} : vector<8x128xi32>
    %cst_11 = arith.constant 0.000000e+00 : f32
    %20 = vector.broadcast %cst_11 : f32 to vector<8x128xf32>
    %21 = vector.extract_strided_slice %5 {offsets = [0, 0], sizes = [1, 128], strides = [1, 1]} : vector<8x128xf32> to vector<1x128xf32>
    %22 = vector.extract_strided_slice %18 {offsets = [0, 0], sizes = [1, 128], strides = [1, 1]} : vector<8x128xf32> to vector<1x128xf32>
    %23 = vector.shape_cast %21 : vector<1x128xf32> to vector<1x128xf32>
    %24 = vector.broadcast %23 : vector<1x128xf32> to vector<128x128xf32>
    %25 = tpu.transpose %24, [1, 0] : vector<128x128xf32> -> vector<128x128xf32>
    %26 = vector.shape_cast %22 : vector<1x128xf32> to vector<1x128xf32>
    %27 = vector.broadcast %26 : vector<1x128xf32> to vector<128x128xf32>
    %28 = tpu.transpose %27, [1, 0] : vector<128x128xf32> -> vector<128x128xf32>
    %29 = arith.cmpf oge, %25, %24 : vector<128x128xf32>
    %cst_12 = arith.constant 0.000000e+00 : f32
    %30 = vector.broadcast %cst_12 : f32 to vector<128x128xf32>
    %31 = arith.select %29, %28, %30 : vector<128x128xi1>, vector<128x128xf32>
    %cst_13 = arith.constant dense<0.000000e+00> : vector<128xf32>
    %32 = vector.multi_reduction <add>, %31, %cst_13 [0] : vector<128x128xf32> to vector<128xf32>
    %33 = vector.shape_cast %32 : vector<128xf32> to vector<1x128xf32>
    %c0_i32 = arith.constant 0 : i32
    %34 = vector.broadcast %c0_i32 : i32 to vector<8x128xi32>
    %35 = arith.cmpi eq, %19, %34 : vector<8x128xi32>
    %36 = vector.shape_cast %33 : vector<1x128xf32> to vector<1x128xf32>
    %37 = vector.broadcast %36 : vector<1x128xf32> to vector<8x128xf32>
    %38 = arith.select %35, %37, %20 : vector<8x128xi1>, vector<8x128xf32>
    %39 = vector.extract_strided_slice %5 {offsets = [1, 0], sizes = [1, 128], strides = [1, 1]} : vector<8x128xf32> to vector<1x128xf32>
    %40 = vector.extract_strided_slice %18 {offsets = [1, 0], sizes = [1, 128], strides = [1, 1]} : vector<8x128xf32> to vector<1x128xf32>
    %41 = vector.shape_cast %39 : vector<1x128xf32> to vector<1x128xf32>
    %42 = vector.broadcast %41 : vector<1x128xf32> to vector<128x128xf32>
    %43 = tpu.transpose %42, [1, 0] : vector<128x128xf32> -> vector<128x128xf32>
    %44 = vector.shape_cast %40 : vector<1x128xf32> to vector<1x128xf32>
    %45 = vector.broadcast %44 : vector<1x128xf32> to vector<128x128xf32>
    %46 = tpu.transpose %45, [1, 0] : vector<128x128xf32> -> vector<128x128xf32>
    %47 = arith.cmpf oge, %43, %42 : vector<128x128xf32>
    %cst_14 = arith.constant 0.000000e+00 : f32
    %48 = vector.broadcast %cst_14 : f32 to vector<128x128xf32>
    %49 = arith.select %47, %46, %48 : vector<128x128xi1>, vector<128x128xf32>
    %cst_15 = arith.constant dense<0.000000e+00> : vector<128xf32>
    %50 = vector.multi_reduction <add>, %49, %cst_15 [0] : vector<128x128xf32> to vector<128xf32>
    %51 = vector.shape_cast %50 : vector<128xf32> to vector<1x128xf32>
    %c1_i32 = arith.constant 1 : i32
    %52 = vector.broadcast %c1_i32 : i32 to vector<8x128xi32>
    %53 = arith.cmpi eq, %19, %52 : vector<8x128xi32>
    %54 = vector.shape_cast %51 : vector<1x128xf32> to vector<1x128xf32>
    %55 = vector.broadcast %54 : vector<1x128xf32> to vector<8x128xf32>
    %56 = arith.select %53, %55, %38 : vector<8x128xi1>, vector<8x128xf32>
    %57 = vector.extract_strided_slice %5 {offsets = [2, 0], sizes = [1, 128], strides = [1, 1]} : vector<8x128xf32> to vector<1x128xf32>
    %58 = vector.extract_strided_slice %18 {offsets = [2, 0], sizes = [1, 128], strides = [1, 1]} : vector<8x128xf32> to vector<1x128xf32>
    %59 = vector.shape_cast %57 : vector<1x128xf32> to vector<1x128xf32>
    %60 = vector.broadcast %59 : vector<1x128xf32> to vector<128x128xf32>
    %61 = tpu.transpose %60, [1, 0] : vector<128x128xf32> -> vector<128x128xf32>
    %62 = vector.shape_cast %58 : vector<1x128xf32> to vector<1x128xf32>
    %63 = vector.broadcast %62 : vector<1x128xf32> to vector<128x128xf32>
    %64 = tpu.transpose %63, [1, 0] : vector<128x128xf32> -> vector<128x128xf32>
    %65 = arith.cmpf oge, %61, %60 : vector<128x128xf32>
    %cst_16 = arith.constant 0.000000e+00 : f32
    %66 = vector.broadcast %cst_16 : f32 to vector<128x128xf32>
    %67 = arith.select %65, %64, %66 : vector<128x128xi1>, vector<128x128xf32>
    %cst_17 = arith.constant dense<0.000000e+00> : vector<128xf32>
    %68 = vector.multi_reduction <add>, %67, %cst_17 [0] : vector<128x128xf32> to vector<128xf32>
    %69 = vector.shape_cast %68 : vector<128xf32> to vector<1x128xf32>
    %c2_i32 = arith.constant 2 : i32
    %70 = vector.broadcast %c2_i32 : i32 to vector<8x128xi32>
    %71 = arith.cmpi eq, %19, %70 : vector<8x128xi32>
    %72 = vector.shape_cast %69 : vector<1x128xf32> to vector<1x128xf32>
    %73 = vector.broadcast %72 : vector<1x128xf32> to vector<8x128xf32>
    %74 = arith.select %71, %73, %56 : vector<8x128xi1>, vector<8x128xf32>
    %75 = vector.extract_strided_slice %5 {offsets = [3, 0], sizes = [1, 128], strides = [1, 1]} : vector<8x128xf32> to vector<1x128xf32>
    %76 = vector.extract_strided_slice %18 {offsets = [3, 0], sizes = [1, 128], strides = [1, 1]} : vector<8x128xf32> to vector<1x128xf32>
    %77 = vector.shape_cast %75 : vector<1x128xf32> to vector<1x128xf32>
    %78 = vector.broadcast %77 : vector<1x128xf32> to vector<128x128xf32>
    %79 = tpu.transpose %78, [1, 0] : vector<128x128xf32> -> vector<128x128xf32>
    %80 = vector.shape_cast %76 : vector<1x128xf32> to vector<1x128xf32>
    %81 = vector.broadcast %80 : vector<1x128xf32> to vector<128x128xf32>
    %82 = tpu.transpose %81, [1, 0] : vector<128x128xf32> -> vector<128x128xf32>
    %83 = arith.cmpf oge, %79, %78 : vector<128x128xf32>
    %cst_18 = arith.constant 0.000000e+00 : f32
    %84 = vector.broadcast %cst_18 : f32 to vector<128x128xf32>
    %85 = arith.select %83, %82, %84 : vector<128x128xi1>, vector<128x128xf32>
    %cst_19 = arith.constant dense<0.000000e+00> : vector<128xf32>
    %86 = vector.multi_reduction <add>, %85, %cst_19 [0] : vector<128x128xf32> to vector<128xf32>
    %87 = vector.shape_cast %86 : vector<128xf32> to vector<1x128xf32>
    %c3_i32 = arith.constant 3 : i32
    %88 = vector.broadcast %c3_i32 : i32 to vector<8x128xi32>
    %89 = arith.cmpi eq, %19, %88 : vector<8x128xi32>
    %90 = vector.shape_cast %87 : vector<1x128xf32> to vector<1x128xf32>
    %91 = vector.broadcast %90 : vector<1x128xf32> to vector<8x128xf32>
    %92 = arith.select %89, %91, %74 : vector<8x128xi1>, vector<8x128xf32>
    %93 = vector.extract_strided_slice %5 {offsets = [4, 0], sizes = [1, 128], strides = [1, 1]} : vector<8x128xf32> to vector<1x128xf32>
    %94 = vector.extract_strided_slice %18 {offsets = [4, 0], sizes = [1, 128], strides = [1, 1]} : vector<8x128xf32> to vector<1x128xf32>
    %95 = vector.shape_cast %93 : vector<1x128xf32> to vector<1x128xf32>
    %96 = vector.broadcast %95 : vector<1x128xf32> to vector<128x128xf32>
    %97 = tpu.transpose %96, [1, 0] : vector<128x128xf32> -> vector<128x128xf32>
    %98 = vector.shape_cast %94 : vector<1x128xf32> to vector<1x128xf32>
    %99 = vector.broadcast %98 : vector<1x128xf32> to vector<128x128xf32>
    %100 = tpu.transpose %99, [1, 0] : vector<128x128xf32> -> vector<128x128xf32>
    %101 = arith.cmpf oge, %97, %96 : vector<128x128xf32>
    %cst_20 = arith.constant 0.000000e+00 : f32
    %102 = vector.broadcast %cst_20 : f32 to vector<128x128xf32>
    %103 = arith.select %101, %100, %102 : vector<128x128xi1>, vector<128x128xf32>
    %cst_21 = arith.constant dense<0.000000e+00> : vector<128xf32>
    %104 = vector.multi_reduction <add>, %103, %cst_21 [0] : vector<128x128xf32> to vector<128xf32>
    %105 = vector.shape_cast %104 : vector<128xf32> to vector<1x128xf32>
    %c4_i32 = arith.constant 4 : i32
    %106 = vector.broadcast %c4_i32 : i32 to vector<8x128xi32>
    %107 = arith.cmpi eq, %19, %106 : vector<8x128xi32>
    %108 = vector.shape_cast %105 : vector<1x128xf32> to vector<1x128xf32>
    %109 = vector.broadcast %108 : vector<1x128xf32> to vector<8x128xf32>
    %110 = arith.select %107, %109, %92 : vector<8x128xi1>, vector<8x128xf32>
    %111 = vector.extract_strided_slice %5 {offsets = [5, 0], sizes = [1, 128], strides = [1, 1]} : vector<8x128xf32> to vector<1x128xf32>
    %112 = vector.extract_strided_slice %18 {offsets = [5, 0], sizes = [1, 128], strides = [1, 1]} : vector<8x128xf32> to vector<1x128xf32>
    %113 = vector.shape_cast %111 : vector<1x128xf32> to vector<1x128xf32>
    %114 = vector.broadcast %113 : vector<1x128xf32> to vector<128x128xf32>
    %115 = tpu.transpose %114, [1, 0] : vector<128x128xf32> -> vector<128x128xf32>
    %116 = vector.shape_cast %112 : vector<1x128xf32> to vector<1x128xf32>
    %117 = vector.broadcast %116 : vector<1x128xf32> to vector<128x128xf32>
    %118 = tpu.transpose %117, [1, 0] : vector<128x128xf32> -> vector<128x128xf32>
    %119 = arith.cmpf oge, %115, %114 : vector<128x128xf32>
    %cst_22 = arith.constant 0.000000e+00 : f32
    %120 = vector.broadcast %cst_22 : f32 to vector<128x128xf32>
    %121 = arith.select %119, %118, %120 : vector<128x128xi1>, vector<128x128xf32>
    %cst_23 = arith.constant dense<0.000000e+00> : vector<128xf32>
    %122 = vector.multi_reduction <add>, %121, %cst_23 [0] : vector<128x128xf32> to vector<128xf32>
    %123 = vector.shape_cast %122 : vector<128xf32> to vector<1x128xf32>
    %c5_i32 = arith.constant 5 : i32
    %124 = vector.broadcast %c5_i32 : i32 to vector<8x128xi32>
    %125 = arith.cmpi eq, %19, %124 : vector<8x128xi32>
    %126 = vector.shape_cast %123 : vector<1x128xf32> to vector<1x128xf32>
    %127 = vector.broadcast %126 : vector<1x128xf32> to vector<8x128xf32>
    %128 = arith.select %125, %127, %110 : vector<8x128xi1>, vector<8x128xf32>
    %129 = vector.extract_strided_slice %5 {offsets = [6, 0], sizes = [1, 128], strides = [1, 1]} : vector<8x128xf32> to vector<1x128xf32>
    %130 = vector.extract_strided_slice %18 {offsets = [6, 0], sizes = [1, 128], strides = [1, 1]} : vector<8x128xf32> to vector<1x128xf32>
    %131 = vector.shape_cast %129 : vector<1x128xf32> to vector<1x128xf32>
    %132 = vector.broadcast %131 : vector<1x128xf32> to vector<128x128xf32>
    %133 = tpu.transpose %132, [1, 0] : vector<128x128xf32> -> vector<128x128xf32>
    %134 = vector.shape_cast %130 : vector<1x128xf32> to vector<1x128xf32>
    %135 = vector.broadcast %134 : vector<1x128xf32> to vector<128x128xf32>
    %136 = tpu.transpose %135, [1, 0] : vector<128x128xf32> -> vector<128x128xf32>
    %137 = arith.cmpf oge, %133, %132 : vector<128x128xf32>
    %cst_24 = arith.constant 0.000000e+00 : f32
    %138 = vector.broadcast %cst_24 : f32 to vector<128x128xf32>
    %139 = arith.select %137, %136, %138 : vector<128x128xi1>, vector<128x128xf32>
    %cst_25 = arith.constant dense<0.000000e+00> : vector<128xf32>
    %140 = vector.multi_reduction <add>, %139, %cst_25 [0] : vector<128x128xf32> to vector<128xf32>
    %141 = vector.shape_cast %140 : vector<128xf32> to vector<1x128xf32>
    %c6_i32 = arith.constant 6 : i32
    %142 = vector.broadcast %c6_i32 : i32 to vector<8x128xi32>
    %143 = arith.cmpi eq, %19, %142 : vector<8x128xi32>
    %144 = vector.shape_cast %141 : vector<1x128xf32> to vector<1x128xf32>
    %145 = vector.broadcast %144 : vector<1x128xf32> to vector<8x128xf32>
    %146 = arith.select %143, %145, %128 : vector<8x128xi1>, vector<8x128xf32>
    %147 = vector.extract_strided_slice %5 {offsets = [7, 0], sizes = [1, 128], strides = [1, 1]} : vector<8x128xf32> to vector<1x128xf32>
    %148 = vector.extract_strided_slice %18 {offsets = [7, 0], sizes = [1, 128], strides = [1, 1]} : vector<8x128xf32> to vector<1x128xf32>
    %149 = vector.shape_cast %147 : vector<1x128xf32> to vector<1x128xf32>
    %150 = vector.broadcast %149 : vector<1x128xf32> to vector<128x128xf32>
    %151 = tpu.transpose %150, [1, 0] : vector<128x128xf32> -> vector<128x128xf32>
    %152 = vector.shape_cast %148 : vector<1x128xf32> to vector<1x128xf32>
    %153 = vector.broadcast %152 : vector<1x128xf32> to vector<128x128xf32>
    %154 = tpu.transpose %153, [1, 0] : vector<128x128xf32> -> vector<128x128xf32>
    %155 = arith.cmpf oge, %151, %150 : vector<128x128xf32>
    %cst_26 = arith.constant 0.000000e+00 : f32
    %156 = vector.broadcast %cst_26 : f32 to vector<128x128xf32>
    %157 = arith.select %155, %154, %156 : vector<128x128xi1>, vector<128x128xf32>
    %cst_27 = arith.constant dense<0.000000e+00> : vector<128xf32>
    %158 = vector.multi_reduction <add>, %157, %cst_27 [0] : vector<128x128xf32> to vector<128xf32>
    %159 = vector.shape_cast %158 : vector<128xf32> to vector<1x128xf32>
    %c7_i32 = arith.constant 7 : i32
    %160 = vector.broadcast %c7_i32 : i32 to vector<8x128xi32>
    %161 = arith.cmpi eq, %19, %160 : vector<8x128xi32>
    %162 = vector.shape_cast %159 : vector<1x128xf32> to vector<1x128xf32>
    %163 = vector.broadcast %162 : vector<1x128xf32> to vector<8x128xf32>
    %164 = arith.select %161, %163, %146 : vector<8x128xi1>, vector<8x128xf32>
    %cst_28 = arith.constant 1.000000e+00 : f32
    %165 = vector.broadcast %cst_28 : f32 to vector<8x128xf32>
    %166 = arith.select %9, %164, %165 : vector<8x128xi1>, vector<8x128xf32>
    %167 = math.log %166 : vector<8x128xf32>
    %168 = vector.broadcast %13 : vector<8x1xf32> to vector<8x128xf32>
    %169 = arith.addf %167, %168 : vector<8x128xf32>
    %cst_29 = arith.constant 0.000000e+00 : f32
    %170 = vector.broadcast %cst_29 : f32 to vector<8x128xf32>
    %171 = arith.cmpf ogt, %3, %170 : vector<8x128xf32>
    %172 = arith.subf %1, %169 : vector<8x128xf32>
    %cst_30 = arith.constant 0.000000e+00 : f32
    %173 = vector.broadcast %cst_30 : f32 to vector<8x128xf32>
    %174 = arith.select %171, %172, %173 : vector<8x128xi1>, vector<8x128xf32>
    %cst_31 = arith.constant 0.000000e+00 : f32
    %175 = vector.broadcast %cst_31 : f32 to vector<8x128xf32>
    %176 = arith.select %9, %3, %175 : vector<8x128xi1>, vector<8x128xf32>
    %cst_32 = arith.constant dense<0.000000e+00> : vector<8xf32>
    %177 = vector.multi_reduction <add>, %176, %cst_32 [1] : vector<8x128xf32> to vector<8xf32>
    %178 = vector.shape_cast %177 : vector<8xf32> to vector<8x1xf32>
    %cst_33 = arith.constant dense<0.000000e+00> : vector<8xf32>
    %179 = vector.multi_reduction <add>, %174, %cst_33 [1] : vector<8x128xf32> to vector<8xf32>
    %180 = vector.shape_cast %179 : vector<8xf32> to vector<8x1xf32>
    %cst_34 = arith.constant 0.000000e+00 : f32
    %181 = vector.broadcast %cst_34 : f32 to vector<8x1xf32>
    %182 = arith.cmpf ogt, %178, %181 : vector<8x1xf32>
    %cst_35 = arith.constant 0.000000e+00 : f32
    %183 = vector.broadcast %cst_35 : f32 to vector<8x1xf32>
    %184 = arith.subf %183, %180 : vector<8x1xf32>
    %cst_36 = arith.constant 1.000000e+00 : f32
    %185 = vector.broadcast %cst_36 : f32 to vector<8x1xf32>
    %186 = arith.maximumf %178, %185 : vector<8x1xf32>
    %187 = arith.divf %184, %186 : vector<8x1xf32>
    %cst_37 = arith.constant 0.000000e+00 : f32
    %188 = vector.broadcast %cst_37 : f32 to vector<8x1xf32>
    %189 = arith.select %182, %187, %188 : vector<8x1xi1>, vector<8x1xf32>
    %190 = vector.shape_cast %189 : vector<8x1xf32> to vector<8x1xf32>
    %191 = vector.broadcast %190 : vector<8x1xf32> to vector<8x128xf32>
    %c0_38 = arith.constant 0 : index
    %c0_39 = arith.constant 0 : index
    %192 = vector.load %arg2[%c0_38, %c0_39] : memref<8x128xf32, #tpu.memory_space<vmem>>, vector<8x128xf32>
    tpu.vector_store %arg2[%c0_38, %c0_39], %191 {strides = array<i32>} : memref<8x128xf32, #tpu.memory_space<vmem>>, vector<8x128xf32>,
    return
  }
  func.func @transform_0(%arg0: i32) -> (i32, i32, i32) {
    %c0_i32 = arith.constant 0 : i32
    %c0_i32_0 = arith.constant 0 : i32
    %c0_i32_1 = arith.constant 0 : i32
    return %c0_i32, %arg0, %c0_i32_0 : i32, i32, i32
  }
  func.func @transform_1(%arg0: i32) -> (i32, i32) {
    %c0_i32 = arith.constant 0 : i32
    %c0_i32_0 = arith.constant 0 : i32
    return %arg0, %c0_i32 : i32, i32
  }
}

</mosaic_0001>

<llo_original>
// kernel: tpu_custom_call.1
$region0: #{tpu_custom_call.1}
  #allocation0 [shape = 'u32[]', space=smem, size = 0x4, offset = 0x4, fixed_abs, tag = 'smem constant byte address 0x4 - core index']
  #allocation1 [shape = 'u32[144,128]{1,0:T(1,128)}', space=vmem, size = 0x12000, scoped, tag = 'internal scratch']
  %s0 = inlined_call_operand.hbm [shape: f32[4,8,128], index: 0, kind: input, shape index: {}]
  %s1 = inlined_call_operand.hbm [shape: f32[8,128], index: 1, kind: output, shape index: {}]
  %s2 = sld [smem:[#allocation0]]
  $region18: #{tpu_custom_call.1} parent=0
    _
  %s4 = ssub.s32 1, %s2
  %s5 = scalar_select 0, %s4, %s2
  $region1: #{tpu_custom_call.1} parent=0
    #allocation2 [shape = 'u8[16384]{0}', space=vmem, size = 0x4000, scoped, tag = 'input window, operand 0, single buffered']
    #allocation3 [shape = 's32[1]{0}', space=sflag, size = 0x4, scoped, tag = 'scoped memory for tpu_custom_call.1']
    #allocation4 [shape = 's32[1]{0}', space=sflag, size = 0x4, scoped, tag = 'scoped memory for tpu_custom_call.1']
    #allocation5 [shape = 'u8[4096]{0}', space=vmem, size = 0x1000, scoped, tag = 'output window, operand 0, single buffered']
    %6 = vsyncpa [#allocation3], 0
    %7 = vsyncpa [#allocation4], 0
    // Predicated region
    $region2: #{tpu_custom_call.1} parent=1 // pred_check
      _
    $region3: #{tpu_custom_call.1} parent=1 // pred_check_branch
      %9 = sbr.rel (0) target = $region5
    $region4: #{tpu_custom_call.1} parent=1 // pred_region
      %s11 = ssub.s32 512, 512
      %12 = vsyncadd [#allocation3], %s11
      %s13 = sshll.u32 [#allocation2], 4
      %s14 = int_to_ptr.vmem [resolvable:$true] %s13
      %19 = dma.hbm_to_vmem [thread:$0]  %s0, 512, %s14, [#allocation3], 128, 128, 8
    $region5: #{tpu_custom_call.1} parent=1 // pred_fallthru
      _
    // Predicated region
    $region6: #{tpu_custom_call.1} parent=1 // pred_check
      _
    $region7: #{tpu_custom_call.1} parent=1 // pred_check_branch
      %21 = sbr.rel (0) target = $region9
    $region8: #{tpu_custom_call.1} parent=1 // pred_region
      %22 = dma.done [#allocation3], 512
    $region9: #{tpu_custom_call.1} parent=1 // pred_fallthru
      _
    %v23 = vld [vmem:[#allocation2] sm:$0xff]
    %s24 = scalar_lea.vmem [#allocation2], 8
    %v25 = vld [vmem:[%s24] sm:$0xff]
    %s26 = scalar_lea.vmem [#allocation2], 16
    %v27 = vld [vmem:[%s26] sm:$0xff]
    %s28 = scalar_lea.vmem [#allocation2], 24
    %v29 = vld [vmem:[%s28] sm:$0xff]
    %vm30 = vcmp.gt.f32.partialorder %v29, 0.0
    %v31 = vsel %vm30, %v23, -1e+30
    %32 = vmax.xlane.f32.xlu0 %v31
    %v33 = vpop.xlane.xlu0 %32
    %v34 = vsub.f32 %v23, %v33
    %v35 = vmul.f32 %v34, 1.442695
    %v36 = vpow.pop %v35
    %v37 = vsel %vm30, %v36, 0.0
    %v38 = vlaneseq
    %v39 = vshrl.u32 %v38, 7
    %v40 = vlaneseq
    %v41 = vshrl.u32 %v40, 7
    %v42 = vsub.s32 0, %v41
    %v43 = vrot.slane %v27, %v42
    %44 = vxpose.xlu0.b32.start [1/16] %v43, 128
    %45 = vxpose.xlu0.b32.cont [2/16] %v43, 128
    %46 = vxpose.xlu0.b32.cont [3/16] %v43, 128
    %47 = vxpose.xlu0.b32.cont [4/16] %v43, 128
    %48 = vxpose.xlu0.b32.cont [5/16] %v43, 128
    %49 = vxpose.xlu0.b32.cont [6/16] %v43, 128
    %50 = vxpose.xlu0.b32.cont [7/16] %v43, 128
    %51 = vxpose.xlu0.b32.cont [8/16] %v43, 128
    %52 = vxpose.xlu0.b32.cont [9/16] %v43, 128
    %53 = vxpose.xlu0.b32.cont [10/16] %v43, 128
    %54 = vxpose.xlu0.b32.cont [11/16] %v43, 128
    %55 = vxpose.xlu0.b32.cont [12/16] %v43, 128
    %56 = vxpose.xlu0.b32.cont [13/16] %v43, 128
    %57 = vxpose.xlu0.b32.cont [14/16] %v43, 128
    %58 = vxpose.xlu0.b32.cont [15/16] %v43, 128
    %59 = vxpose.xlu0.b32.end [16/16] %v43, 128
    %v60 = vpop.trf.xlu0
    %v61 = vpop.trf.xlu0
    %v62 = vpop.trf.xlu0
    %v63 = vpop.trf.xlu0
    %v64 = vpop.trf.xlu0
    %v65 = vpop.trf.xlu0
    %v66 = vpop.trf.xlu0
    %v67 = vpop.trf.xlu0
    %v68 = vpop.trf.xlu0
    %v69 = vpop.trf.xlu0
    %v70 = vpop.trf.xlu0
    %v71 = vpop.trf.xlu0
    %v72 = vpop.trf.xlu0
    %v73 = vpop.trf.xlu0
    %v74 = vpop.trf.xlu0
    %v75 = vpop.trf.xlu0
    %v76 = vlaneseq
    %v77 = vshrl.u32 %v76, 7
    %v78 = vsub.s32 0, %v77
    %v79 = vrot.slane %v37, %v78
    %80 = vxpose.xlu0.b32.start [1/16] %v79, 128
    %81 = vxpose.xlu0.b32.cont [2/16] %v79, 128
    %82 = vxpose.xlu0.b32.cont [3/16] %v79, 128
    %83 = vxpose.xlu0.b32.cont [4/16] %v79, 128
    %84 = vxpose.xlu0.b32.cont [5/16] %v79, 128
    %85 = vxpose.xlu0.b32.cont [6/16] %v79, 128
    %86 = vxpose.xlu0.b32.cont [7/16] %v79, 128
    %87 = vxpose.xlu0.b32.cont [8/16] %v79, 128
    %88 = vxpose.xlu0.b32.cont [9/16] %v79, 128
    %89 = vxpose.xlu0.b32.cont [10/16] %v79, 128
    %90 = vxpose.xlu0.b32.cont [11/16] %v79, 128
    %91 = vxpose.xlu0.b32.cont [12/16] %v79, 128
    %92 = vxpose.xlu0.b32.cont [13/16] %v79, 128
    %93 = vxpose.xlu0.b32.cont [14/16] %v79, 128
    %94 = vxpose.xlu0.b32.cont [15/16] %v79, 128
    %95 = vxpose.xlu0.b32.end [16/16] %v79, 128
    %v96 = vpop.trf.xlu0
    %v97 = vpop.trf.xlu0
    %v98 = vpop.trf.xlu0
    %v99 = vpop.trf.xlu0
    %v100 = vpop.trf.xlu0
    %v101 = vpop.trf.xlu0
    %v102 = vpop.trf.xlu0
    %v103 = vpop.trf.xlu0
    %v104 = vpop.trf.xlu0
    %v105 = vpop.trf.xlu0
    %v106 = vpop.trf.xlu0
    %v107 = vpop.trf.xlu0
    %v108 = vpop.trf.xlu0
    %v109 = vpop.trf.xlu0
    %v110 = vpop.trf.xlu0
    %v111 = vpop.trf.xlu0
    %vm112 = vcmp.ge.f32.partialorder %v60, %v43
    %vm113 = vcmp.ge.f32.partialorder %v61, %v43
    %vm114 = vcmp.ge.f32.partialorder %v62, %v43
    %vm115 = vcmp.ge.f32.partialorder %v63, %v43
    %vm116 = vcmp.ge.f32.partialorder %v64, %v43
    %vm117 = vcmp.ge.f32.partialorder %v65, %v43
    %vm118 = vcmp.ge.f32.partialorder %v66, %v43
    %vm119 = vcmp.ge.f32.partialorder %v67, %v43
    %vm120 = vcmp.ge.f32.partialorder %v68, %v43
    %vm121 = vcmp.ge.f32.partialorder %v69, %v43
    %vm122 = vcmp.ge.f32.partialorder %v70, %v43
    %vm123 = vcmp.ge.f32.partialorder %v71, %v43
    %vm124 = vcmp.ge.f32.partialorder %v72, %v43
    %vm125 = vcmp.ge.f32.partialorder %v73, %v43
    %vm126 = vcmp.ge.f32.partialorder %v74, %v43
    %vm127 = vcmp.ge.f32.partialorder %v75, %v43
    %v128 = vsel %vm112, %v96, 0.0
    %v129 = vsel %vm113, %v97, 0.0
    %v130 = vsel %vm114, %v98, 0.0
    %v131 = vsel %vm115, %v99, 0.0
    %v132 = vsel %vm116, %v100, 0.0
    %v133 = vsel %vm117, %v101, 0.0
    %v134 = vsel %vm118, %v102, 0.0
    %v135 = vsel %vm119, %v103, 0.0
    %v136 = vsel %vm120, %v104, 0.0
    %v137 = vsel %vm121, %v105, 0.0
    %v138 = vsel %vm122, %v106, 0.0
    %v139 = vsel %vm123, %v107, 0.0
    %v140 = vsel %vm124, %v108, 0.0
    %v141 = vsel %vm125, %v109, 0.0
    %v142 = vsel %vm126, %v110, 0.0
    %v143 = vsel %vm127, %v111, 0.0
    %v144 = vadd.f32 %v128, %v129
    %v145 = vadd.f32 %v144, %v130
    %v146 = vadd.f32 %v145, %v131
    %v147 = vadd.f32 %v146, %v132
    %v148 = vadd.f32 %v147, %v133
    %v149 = vadd.f32 %v148, %v134
    %v150 = vadd.f32 %v149, %v135
    %v151 = vadd.f32 %v150, %v136
    %v152 = vadd.f32 %v151, %v137
    %v153 = vadd.f32 %v152, %v138
    %v154 = vadd.f32 %v153, %v139
    %v155 = vadd.f32 %v154, %v140
    %v156 = vadd.f32 %v155, %v141
    %v157 = vadd.f32 %v156, %v142
    %v158 = vadd.f32 %v157, %v143
    %v159 = vrot.slane %v158, 4
    %v160 = vadd.f32 %v158, %v159
    %v161 = vrot.slane %v160, 2
    %v162 = vadd.f32 %v160, %v161
    %v163 = vrot.slane %v162, 1
    %v164 = vadd.f32 %v162, %v163
    %vm165 = vcmp.eq.s32.totalorder %v39, 0
    %v166 = vsel %vm165, %v164, 0.0
    %v167 = vlaneseq
    %v168 = vshrl.u32 %v167, 7
    %v169 = vsub.s32 1, %v168
    %v170 = vrot.slane %v27, %v169
    %171 = vxpose.xlu0.b32.start [1/16] %v170, 128
    %172 = vxpose.xlu0.b32.cont [2/16] %v170, 128
    %173 = vxpose.xlu0.b32.cont [3/16] %v170, 128
    %174 = vxpose.xlu0.b32.cont [4/16] %v170, 128
    %175 = vxpose.xlu0.b32.cont [5/16] %v170, 128
    %176 = vxpose.xlu0.b32.cont [6/16] %v170, 128
    %177 = vxpose.xlu0.b32.cont [7/16] %v170, 128
    %178 = vxpose.xlu0.b32.cont [8/16] %v170, 128
    %179 = vxpose.xlu0.b32.cont [9/16] %v170, 128
    %180 = vxpose.xlu0.b32.cont [10/16] %v170, 128
    %181 = vxpose.xlu0.b32.cont [11/16] %v170, 128
    %182 = vxpose.xlu0.b32.cont [12/16] %v170, 128
    %183 = vxpose.xlu0.b32.cont [13/16] %v170, 128
    %184 = vxpose.xlu0.b32.cont [14/16] %v170, 128
    %185 = vxpose.xlu0.b32.cont [15/16] %v170, 128
    %186 = vxpose.xlu0.b32.end [16/16] %v170, 128
    %v187 = vpop.trf.xlu0
    %v188 = vpop.trf.xlu0
    %v189 = vpop.trf.xlu0
    %v190 = vpop.trf.xlu0
    %v191 = vpop.trf.xlu0
    %v192 = vpop.trf.xlu0
    %v193 = vpop.trf.xlu0
    %v194 = vpop.trf.xlu0
    %v195 = vpop.trf.xlu0
    %v196 = vpop.trf.xlu0
    %v197 = vpop.trf.xlu0
    %v198 = vpop.trf.xlu0
    %v199 = vpop.trf.xlu0
    %v200 = vpop.trf.xlu0
    %v201 = vpop.trf.xlu0
    %v202 = vpop.trf.xlu0
    %v203 = vlaneseq
    %v204 = vshrl.u32 %v203, 7
    %v205 = vsub.s32 1, %v204
    %v206 = vrot.slane %v37, %v205
    %207 = vxpose.xlu0.b32.start [1/16] %v206, 128
    %208 = vxpose.xlu0.b32.cont [2/16] %v206, 128
    %209 = vxpose.xlu0.b32.cont [3/16] %v206, 128
    %210 = vxpose.xlu0.b32.cont [4/16] %v206, 128
    %211 = vxpose.xlu0.b32.cont [5/16] %v206, 128
    %212 = vxpose.xlu0.b32.cont [6/16] %v206, 128
    %213 = vxpose.xlu0.b32.cont [7/16] %v206, 128
    %214 = vxpose.xlu0.b32.cont [8/16] %v206, 128
    %215 = vxpose.xlu0.b32.cont [9/16] %v206, 128
    %216 = vxpose.xlu0.b32.cont [10/16] %v206, 128
    %217 = vxpose.xlu0.b32.cont [11/16] %v206, 128
    %218 = vxpose.xlu0.b32.cont [12/16] %v206, 128
    %219 = vxpose.xlu0.b32.cont [13/16] %v206, 128
    %220 = vxpose.xlu0.b32.cont [14/16] %v206, 128
    %221 = vxpose.xlu0.b32.cont [15/16] %v206, 128
    %222 = vxpose.xlu0.b32.end [16/16] %v206, 128
    %v223 = vpop.trf.xlu0
    %v224 = vpop.trf.xlu0
    %v225 = vpop.trf.xlu0
    %v226 = vpop.trf.xlu0
    %v227 = vpop.trf.xlu0
    %v228 = vpop.trf.xlu0
    %v229 = vpop.trf.xlu0
    %v230 = vpop.trf.xlu0
    %v231 = vpop.trf.xlu0
    %v232 = vpop.trf.xlu0
    %v233 = vpop.trf.xlu0
    %v234 = vpop.trf.xlu0
    %v235 = vpop.trf.xlu0
    %v236 = vpop.trf.xlu0
    %v237 = vpop.trf.xlu0
    %v238 = vpop.trf.xlu0
    %vm239 = vcmp.ge.f32.partialorder %v187, %v170
    %vm240 = vcmp.ge.f32.partialorder %v188, %v170
    %vm241 = vcmp.ge.f32.partialorder %v189, %v170
    %vm242 = vcmp.ge.f32.partialorder %v190, %v170
    %vm243 = vcmp.ge.f32.partialorder %v191, %v170
    %vm244 = vcmp.ge.f32.partialorder %v192, %v170
    %vm245 = vcmp.ge.f32.partialorder %v193, %v170
    %vm246 = vcmp.ge.f32.partialorder %v194, %v170
    %vm247 = vcmp.ge.f32.partialorder %v195, %v170
    %vm248 = vcmp.ge.f32.partialorder %v196, %v170
    %vm249 = vcmp.ge.f32.partialorder %v197, %v170
    %vm250 = vcmp.ge.f32.partialorder %v198, %v170
    %vm251 = vcmp.ge.f32.partialorder %v199, %v170
    %vm252 = vcmp.ge.f32.partialorder %v200, %v170
    %vm253 = vcmp.ge.f32.partialorder %v201, %v170
    %vm254 = vcmp.ge.f32.partialorder %v202, %v170
    %v255 = vsel %vm239, %v223, 0.0
    %v256 = vsel %vm240, %v224, 0.0
    %v257 = vsel %vm241, %v225, 0.0
    %v258 = vsel %vm242, %v226, 0.0
    %v259 = vsel %vm243, %v227, 0.0
    %v260 = vsel %vm244, %v228, 0.0
    %v261 = vsel %vm245, %v229, 0.0
    %v262 = vsel %vm246, %v230, 0.0
    %v263 = vsel %vm247, %v231, 0.0
    %v264 = vsel %vm248, %v232, 0.0
    %v265 = vsel %vm249, %v233, 0.0
    %v266 = vsel %vm250, %v234, 0.0
    %v267 = vsel %vm251, %v235, 0.0
    %v268 = vsel %vm252, %v236, 0.0
    %v269 = vsel %vm253, %v237, 0.0
    %v270 = vsel %vm254, %v238, 0.0
    %v271 = vadd.f32 %v255, %v256
    %v272 = vadd.f32 %v271, %v257
    %v273 = vadd.f32 %v272, %v258
    %v274 = vadd.f32 %v273, %v259
    %v275 = vadd.f32 %v274, %v260
    %v276 = vadd.f32 %v275, %v261
    %v277 = vadd.f32 %v276, %v262
    %v278 = vadd.f32 %v277, %v263
    %v279 = vadd.f32 %v278, %v264
    %v280 = vadd.f32 %v279, %v265
    %v281 = vadd.f32 %v280, %v266
    %v282 = vadd.f32 %v281, %v267
    %v283 = vadd.f32 %v282, %v268
    %v284 = vadd.f32 %v283, %v269
    %v285 = vadd.f32 %v284, %v270
    %v286 = vrot.slane %v285, 4
    %v287 = vadd.f32 %v285, %v286
    %v288 = vrot.slane %v287, 2
    %v289 = vadd.f32 %v287, %v288
    %v290 = vrot.slane %v289, 1
    %v291 = vadd.f32 %v289, %v290
    %vm292 = vcmp.eq.s32.totalorder %v39, 1
    %v293 = vsel %vm292, %v291, %v166
    %v294 = vlaneseq
    %v295 = vshrl.u32 %v294, 7
    %v296 = vsub.s32 2, %v295
    %v297 = vrot.slane %v27, %v296
    %298 = vxpose.xlu0.b32.start [1/16] %v297, 128
    %299 = vxpose.xlu0.b32.cont [2/16] %v297, 128
    %300 = vxpose.xlu0.b32.cont [3/16] %v297, 128
    %301 = vxpose.xlu0.b32.cont [4/16] %v297, 128
    %302 = vxpose.xlu0.b32.cont [5/16] %v297, 128
    %303 = vxpose.xlu0.b32.cont [6/16] %v297, 128
    %304 = vxpose.xlu0.b32.cont [7/16] %v297, 128
    %305 = vxpose.xlu0.b32.cont [8/16] %v297, 128
    %306 = vxpose.xlu0.b32.cont [9/16] %v297, 128
    %307 = vxpose.xlu0.b32.cont [10/16] %v297, 128
    %308 = vxpose.xlu0.b32.cont [11/16] %v297, 128
    %309 = vxpose.xlu0.b32.cont [12/16] %v297, 128
    %310 = vxpose.xlu0.b32.cont [13/16] %v297, 128
    %311 = vxpose.xlu0.b32.cont [14/16] %v297, 128
    %312 = vxpose.xlu0.b32.cont [15/16] %v297, 128
    %313 = vxpose.xlu0.b32.end [16/16] %v297, 128
    %v314 = vpop.trf.xlu0
    %v315 = vpop.trf.xlu0
    %v316 = vpop.trf.xlu0
    %v317 = vpop.trf.xlu0
    %v318 = vpop.trf.xlu0
    %v319 = vpop.trf.xlu0
    %v320 = vpop.trf.xlu0
    %v321 = vpop.trf.xlu0
    %v322 = vpop.trf.xlu0
    %v323 = vpop.trf.xlu0
    %v324 = vpop.trf.xlu0
    %v325 = vpop.trf.xlu0
    %v326 = vpop.trf.xlu0
    %v327 = vpop.trf.xlu0
    %v328 = vpop.trf.xlu0
    %v329 = vpop.trf.xlu0
    %v330 = vlaneseq
    %v331 = vshrl.u32 %v330, 7
    %v332 = vsub.s32 2, %v331
    %v333 = vrot.slane %v37, %v332
    %334 = vxpose.xlu0.b32.start [1/16] %v333, 128
    %335 = vxpose.xlu0.b32.cont [2/16] %v333, 128
    %336 = vxpose.xlu0.b32.cont [3/16] %v333, 128
    %337 = vxpose.xlu0.b32.cont [4/16] %v333, 128
    %338 = vxpose.xlu0.b32.cont [5/16] %v333, 128
    %339 = vxpose.xlu0.b32.cont [6/16] %v333, 128
    %340 = vxpose.xlu0.b32.cont [7/16] %v333, 128
    %341 = vxpose.xlu0.b32.cont [8/16] %v333, 128
    %342 = vxpose.xlu0.b32.cont [9/16] %v333, 128
    %343 = vxpose.xlu0.b32.cont [10/16] %v333, 128
    %344 = vxpose.xlu0.b32.cont [11/16] %v333, 128
    %345 = vxpose.xlu0.b32.cont [12/16] %v333, 128
    %346 = vxpose.xlu0.b32.cont [13/16] %v333, 128
    %347 = vxpose.xlu0.b32.cont [14/16] %v333, 128
    %348 = vxpose.xlu0.b32.cont [15/16] %v333, 128
    %349 = vxpose.xlu0.b32.end [16/16] %v333, 128
    %v350 = vpop.trf.xlu0
    %v351 = vpop.trf.xlu0
    %v352 = vpop.trf.xlu0
    %v353 = vpop.trf.xlu0
    %v354 = vpop.trf.xlu0
    %v355 = vpop.trf.xlu0
    %v356 = vpop.trf.xlu0
    %v357 = vpop.trf.xlu0
    %v358 = vpop.trf.xlu0
    %v359 = vpop.trf.xlu0
    %v360 = vpop.trf.xlu0
    %v361 = vpop.trf.xlu0
    %v362 = vpop.trf.xlu0
    %v363 = vpop.trf.xlu0
    %v364 = vpop.trf.xlu0
    %v365 = vpop.trf.xlu0
    %vm366 = vcmp.ge.f32.partialorder %v314, %v297
    %vm367 = vcmp.ge.f32.partialorder %v315, %v297
    %vm368 = vcmp.ge.f32.partialorder %v316, %v297
    %vm369 = vcmp.ge.f32.partialorder %v317, %v297
    %vm370 = vcmp.ge.f32.partialorder %v318, %v297
    %vm371 = vcmp.ge.f32.partialorder %v319, %v297
    %vm372 = vcmp.ge.f32.partialorder %v320, %v297
    %vm373 = vcmp.ge.f32.partialorder %v321, %v297
    %vm374 = vcmp.ge.f32.partialorder %v322, %v297
    %vm375 = vcmp.ge.f32.partialorder %v323, %v297
    %vm376 = vcmp.ge.f32.partialorder %v324, %v297
    %vm377 = vcmp.ge.f32.partialorder %v325, %v297
    %vm378 = vcmp.ge.f32.partialorder %v326, %v297
    %vm379 = vcmp.ge.f32.partialorder %v327, %v297
    %vm380 = vcmp.ge.f32.partialorder %v328, %v297
    %vm381 = vcmp.ge.f32.partialorder %v329, %v297
    %v382 = vsel %vm366, %v350, 0.0
    %v383 = vsel %vm367, %v351, 0.0
    %v384 = vsel %vm368, %v352, 0.0
    %v385 = vsel %vm369, %v353, 0.0
    %v386 = vsel %vm370, %v354, 0.0
    %v387 = vsel %vm371, %v355, 0.0
    %v388 = vsel %vm372, %v356, 0.0
    %v389 = vsel %vm373, %v357, 0.0
    %v390 = vsel %vm374, %v358, 0.0
    %v391 = vsel %vm375, %v359, 0.0
    %v392 = vsel %vm376, %v360, 0.0
    %v393 = vsel %vm377, %v361, 0.0
    %v394 = vsel %vm378, %v362, 0.0
    %v395 = vsel %vm379, %v363, 0.0
    %v396 = vsel %vm380, %v364, 0.0
    %v397 = vsel %vm381, %v365, 0.0
    %v398 = vadd.f32 %v382, %v383
    %v399 = vadd.f32 %v398, %v384
    %v400 = vadd.f32 %v399, %v385
    %v401 = vadd.f32 %v400, %v386
    %v402 = vadd.f32 %v401, %v387
    %v403 = vadd.f32 %v402, %v388
    %v404 = vadd.f32 %v403, %v389
    %v405 = vadd.f32 %v404, %v390
    %v406 = vadd.f32 %v405, %v391
    %v407 = vadd.f32 %v406, %v392
    %v408 = vadd.f32 %v407, %v393
    %v409 = vadd.f32 %v408, %v394
    %v410 = vadd.f32 %v409, %v395
    %v411 = vadd.f32 %v410, %v396
    %v412 = vadd.f32 %v411, %v397
    %v413 = vrot.slane %v412, 4
    %v414 = vadd.f32 %v412, %v413
    %v415 = vrot.slane %v414, 2
    %v416 = vadd.f32 %v414, %v415
    %v417 = vrot.slane %v416, 1
    %v418 = vadd.f32 %v416, %v417
    %vm419 = vcmp.eq.s32.totalorder %v39, 2
    %v420 = vsel %vm419, %v418, %v293
    %v421 = vlaneseq
    %v422 = vshrl.u32 %v421, 7
    %v423 = vsub.s32 3, %v422
    %v424 = vrot.slane %v27, %v423
    %425 = vxpose.xlu0.b32.start [1/16] %v424, 128
    %426 = vxpose.xlu0.b32.cont [2/16] %v424, 128
    %427 = vxpose.xlu0.b32.cont [3/16] %v424, 128
    %428 = vxpose.xlu0.b32.cont [4/16] %v424, 128
    %429 = vxpose.xlu0.b32.cont [5/16] %v424, 128
    %430 = vxpose.xlu0.b32.cont [6/16] %v424, 128
    %431 = vxpose.xlu0.b32.cont [7/16] %v424, 128
    %432 = vxpose.xlu0.b32.cont [8/16] %v424, 128
    %433 = vxpose.xlu0.b32.cont [9/16] %v424, 128
    %434 = vxpose.xlu0.b32.cont [10/16] %v424, 128
    %435 = vxpose.xlu0.b32.cont [11/16] %v424, 128
    %436 = vxpose.xlu0.b32.cont [12/16] %v424, 128
    %437 = vxpose.xlu0.b32.cont [13/16] %v424, 128
    %438 = vxpose.xlu0.b32.cont [14/16] %v424, 128
    %439 = vxpose.xlu0.b32.cont [15/16] %v424, 128
    %440 = vxpose.xlu0.b32.end [16/16] %v424, 128
    %v441 = vpop.trf.xlu0
    %v442 = vpop.trf.xlu0
    %v443 = vpop.trf.xlu0
    %v444 = vpop.trf.xlu0
    %v445 = vpop.trf.xlu0
    %v446 = vpop.trf.xlu0
    %v447 = vpop.trf.xlu0
    %v448 = vpop.trf.xlu0
    %v449 = vpop.trf.xlu0
    %v450 = vpop.trf.xlu0
    %v451 = vpop.trf.xlu0
    %v452 = vpop.trf.xlu0
    %v453 = vpop.trf.xlu0
    %v454 = vpop.trf.xlu0
    %v455 = vpop.trf.xlu0
    %v456 = vpop.trf.xlu0
    %v457 = vlaneseq
    %v458 = vshrl.u32 %v457, 7
    %v459 = vsub.s32 3, %v458
    %v460 = vrot.slane %v37, %v459
    %461 = vxpose.xlu0.b32.start [1/16] %v460, 128
    %462 = vxpose.xlu0.b32.cont [2/16] %v460, 128
    %463 = vxpose.xlu0.b32.cont [3/16] %v460, 128
    %464 = vxpose.xlu0.b32.cont [4/16] %v460, 128
    %465 = vxpose.xlu0.b32.cont [5/16] %v460, 128
    %466 = vxpose.xlu0.b32.cont [6/16] %v460, 128
    %467 = vxpose.xlu0.b32.cont [7/16] %v460, 128
    %468 = vxpose.xlu0.b32.cont [8/16] %v460, 128
    %469 = vxpose.xlu0.b32.cont [9/16] %v460, 128
    %470 = vxpose.xlu0.b32.cont [10/16] %v460, 128
    %471 = vxpose.xlu0.b32.cont [11/16] %v460, 128
    %472 = vxpose.xlu0.b32.cont [12/16] %v460, 128
    %473 = vxpose.xlu0.b32.cont [13/16] %v460, 128
    %474 = vxpose.xlu0.b32.cont [14/16] %v460, 128
    %475 = vxpose.xlu0.b32.cont [15/16] %v460, 128
    %476 = vxpose.xlu0.b32.end [16/16] %v460, 128
    %v477 = vpop.trf.xlu0
    %v478 = vpop.trf.xlu0
    %v479 = vpop.trf.xlu0
    %v480 = vpop.trf.xlu0
    %v481 = vpop.trf.xlu0
    %v482 = vpop.trf.xlu0
    %v483 = vpop.trf.xlu0
    %v484 = vpop.trf.xlu0
    %v485 = vpop.trf.xlu0
    %v486 = vpop.trf.xlu0
    %v487 = vpop.trf.xlu0
    %v488 = vpop.trf.xlu0
    %v489 = vpop.trf.xlu0
    %v490 = vpop.trf.xlu0
    %v491 = vpop.trf.xlu0
    %v492 = vpop.trf.xlu0
    %vm493 = vcmp.ge.f32.partialorder %v441, %v424
    %vm494 = vcmp.ge.f32.partialorder %v442, %v424
    %vm495 = vcmp.ge.f32.partialorder %v443, %v424
    %vm496 = vcmp.ge.f32.partialorder %v444, %v424
    %vm497 = vcmp.ge.f32.partialorder %v445, %v424
    %vm498 = vcmp.ge.f32.partialorder %v446, %v424
    %vm499 = vcmp.ge.f32.partialorder %v447, %v424
    %vm500 = vcmp.ge.f32.partialorder %v448, %v424
    %vm501 = vcmp.ge.f32.partialorder %v449, %v424
    %vm502 = vcmp.ge.f32.partialorder %v450, %v424
    %vm503 = vcmp.ge.f32.partialorder %v451, %v424
    %vm504 = vcmp.ge.f32.partialorder %v452, %v424
    %vm505 = vcmp.ge.f32.partialorder %v453, %v424
    %vm506 = vcmp.ge.f32.partialorder %v454, %v424
    %vm507 = vcmp.ge.f32.partialorder %v455, %v424
    %vm508 = vcmp.ge.f32.partialorder %v456, %v424
    %v509 = vsel %vm493, %v477, 0.0
    %v510 = vsel %vm494, %v478, 0.0
    %v511 = vsel %vm495, %v479, 0.0
    %v512 = vsel %vm496, %v480, 0.0
    %v513 = vsel %vm497, %v481, 0.0
    %v514 = vsel %vm498, %v482, 0.0
    %v515 = vsel %vm499, %v483, 0.0
    %v516 = vsel %vm500, %v484, 0.0
    %v517 = vsel %vm501, %v485, 0.0
    %v518 = vsel %vm502, %v486, 0.0
    %v519 = vsel %vm503, %v487, 0.0
    %v520 = vsel %vm504, %v488, 0.0
    %v521 = vsel %vm505, %v489, 0.0
    %v522 = vsel %vm506, %v490, 0.0
    %v523 = vsel %vm507, %v491, 0.0
    %v524 = vsel %vm508, %v492, 0.0
    %v525 = vadd.f32 %v509, %v510
    %v526 = vadd.f32 %v525, %v511
    %v527 = vadd.f32 %v526, %v512
    %v528 = vadd.f32 %v527, %v513
    %v529 = vadd.f32 %v528, %v514
    %v530 = vadd.f32 %v529, %v515
    %v531 = vadd.f32 %v530, %v516
    %v532 = vadd.f32 %v531, %v517
    %v533 = vadd.f32 %v532, %v518
    %v534 = vadd.f32 %v533, %v519
    %v535 = vadd.f32 %v534, %v520
    %v536 = vadd.f32 %v535, %v521
    %v537 = vadd.f32 %v536, %v522
    %v538 = vadd.f32 %v537, %v523
    %v539 = vadd.f32 %v538, %v524
    %v540 = vrot.slane %v539, 4
    %v541 = vadd.f32 %v539, %v540
    %v542 = vrot.slane %v541, 2
    %v543 = vadd.f32 %v541, %v542
    %v544 = vrot.slane %v543, 1
    %v545 = vadd.f32 %v543, %v544
    %vm546 = vcmp.eq.s32.totalorder %v39, 3
    %v547 = vsel %vm546, %v545, %v420
    %v548 = vlaneseq
    %v549 = vshrl.u32 %v548, 7
    %v550 = vsub.s32 4, %v549
    %v551 = vrot.slane %v27, %v550
    %552 = vxpose.xlu0.b32.start [1/16] %v551, 128
    %553 = vxpose.xlu0.b32.cont [2/16] %v551, 128
    %554 = vxpose.xlu0.b32.cont [3/16] %v551, 128
    %555 = vxpose.xlu0.b32.cont [4/16] %v551, 128
    %556 = vxpose.xlu0.b32.cont [5/16] %v551, 128
    %557 = vxpose.xlu0.b32.cont [6/16] %v551, 128
    %558 = vxpose.xlu0.b32.cont [7/16] %v551, 128
    %559 = vxpose.xlu0.b32.cont [8/16] %v551, 128
    %560 = vxpose.xlu0.b32.cont [9/16] %v551, 128
    %561 = vxpose.xlu0.b32.cont [10/16] %v551, 128
    %562 = vxpose.xlu0.b32.cont [11/16] %v551, 128
    %563 = vxpose.xlu0.b32.cont [12/16] %v551, 128
    %564 = vxpose.xlu0.b32.cont [13/16] %v551, 128
    %565 = vxpose.xlu0.b32.cont [14/16] %v551, 128
    %566 = vxpose.xlu0.b32.cont [15/16] %v551, 128
    %567 = vxpose.xlu0.b32.end [16/16] %v551, 128
    %v568 = vpop.trf.xlu0
    %v569 = vpop.trf.xlu0
    %v570 = vpop.trf.xlu0
    %v571 = vpop.trf.xlu0
    %v572 = vpop.trf.xlu0
    %v573 = vpop.trf.xlu0
    %v574 = vpop.trf.xlu0
    %v575 = vpop.trf.xlu0
    %v576 = vpop.trf.xlu0
    %v577 = vpop.trf.xlu0
    %v578 = vpop.trf.xlu0
    %v579 = vpop.trf.xlu0
    %v580 = vpop.trf.xlu0
    %v581 = vpop.trf.xlu0
    %v582 = vpop.trf.xlu0
    %v583 = vpop.trf.xlu0
    %v584 = vlaneseq
    %v585 = vshrl.u32 %v584, 7
    %v586 = vsub.s32 4, %v585
    %v587 = vrot.slane %v37, %v586
    %588 = vxpose.xlu0.b32.start [1/16] %v587, 128
    %589 = vxpose.xlu0.b32.cont [2/16] %v587, 128
    %590 = vxpose.xlu0.b32.cont [3/16] %v587, 128
    %591 = vxpose.xlu0.b32.cont [4/16] %v587, 128
    %592 = vxpose.xlu0.b32.cont [5/16] %v587, 128
    %593 = vxpose.xlu0.b32.cont [6/16] %v587, 128
    %594 = vxpose.xlu0.b32.cont [7/16] %v587, 128
    %595 = vxpose.xlu0.b32.cont [8/16] %v587, 128
    %596 = vxpose.xlu0.b32.cont [9/16] %v587, 128
    %597 = vxpose.xlu0.b32.cont [10/16] %v587, 128
    %598 = vxpose.xlu0.b32.cont [11/16] %v587, 128
    %599 = vxpose.xlu0.b32.cont [12/16] %v587, 128
    %600 = vxpose.xlu0.b32.cont [13/16] %v587, 128
    %601 = vxpose.xlu0.b32.cont [14/16] %v587, 128
    %602 = vxpose.xlu0.b32.cont [15/16] %v587, 128
    %603 = vxpose.xlu0.b32.end [16/16] %v587, 128
    %v604 = vpop.trf.xlu0
    %v605 = vpop.trf.xlu0
    %v606 = vpop.trf.xlu0
    %v607 = vpop.trf.xlu0
    %v608 = vpop.trf.xlu0
    %v609 = vpop.trf.xlu0
    %v610 = vpop.trf.xlu0
    %v611 = vpop.trf.xlu0
    %v612 = vpop.trf.xlu0
    %v613 = vpop.trf.xlu0
    %v614 = vpop.trf.xlu0
    %v615 = vpop.trf.xlu0
    %v616 = vpop.trf.xlu0
    %v617 = vpop.trf.xlu0
    %v618 = vpop.trf.xlu0
    %v619 = vpop.trf.xlu0
    %vm620 = vcmp.ge.f32.partialorder %v568, %v551
    %vm621 = vcmp.ge.f32.partialorder %v569, %v551
    %vm622 = vcmp.ge.f32.partialorder %v570, %v551
    %vm623 = vcmp.ge.f32.partialorder %v571, %v551
    %vm624 = vcmp.ge.f32.partialorder %v572, %v551
    %vm625 = vcmp.ge.f32.partialorder %v573, %v551
    %vm626 = vcmp.ge.f32.partialorder %v574, %v551
    %vm627 = vcmp.ge.f32.partialorder %v575, %v551
    %vm628 = vcmp.ge.f32.partialorder %v576, %v551
    %vm629 = vcmp.ge.f32.partialorder %v577, %v551
    %vm630 = vcmp.ge.f32.partialorder %v578, %v551
    %vm631 = vcmp.ge.f32.partialorder %v579, %v551
    %vm632 = vcmp.ge.f32.partialorder %v580, %v551
    %vm633 = vcmp.ge.f32.partialorder %v581, %v551
    %vm634 = vcmp.ge.f32.partialorder %v582, %v551
    %vm635 = vcmp.ge.f32.partialorder %v583, %v551
    %v636 = vsel %vm620, %v604, 0.0
    %v637 = vsel %vm621, %v605, 0.0
    %v638 = vsel %vm622, %v606, 0.0
    %v639 = vsel %vm623, %v607, 0.0
    %v640 = vsel %vm624, %v608, 0.0
    %v641 = vsel %vm625, %v609, 0.0
    %v642 = vsel %vm626, %v610, 0.0
    %v643 = vsel %vm627, %v611, 0.0
    %v644 = vsel %vm628, %v612, 0.0
    %v645 = vsel %vm629, %v613, 0.0
    %v646 = vsel %vm630, %v614, 0.0
    %v647 = vsel %vm631, %v615, 0.0
    %v648 = vsel %vm632, %v616, 0.0
    %v649 = vsel %vm633, %v617, 0.0
    %v650 = vsel %vm634, %v618, 0.0
    %v651 = vsel %vm635, %v619, 0.0
    %v652 = vadd.f32 %v636, %v637
    %v653 = vadd.f32 %v652, %v638
    %v654 = vadd.f32 %v653, %v639
    %v655 = vadd.f32 %v654, %v640
    %v656 = vadd.f32 %v655, %v641
    %v657 = vadd.f32 %v656, %v642
    %v658 = vadd.f32 %v657, %v643
    %v659 = vadd.f32 %v658, %v644
    %v660 = vadd.f32 %v659, %v645
    %v661 = vadd.f32 %v660, %v646
    %v662 = vadd.f32 %v661, %v647
    %v663 = vadd.f32 %v662, %v648
    %v664 = vadd.f32 %v663, %v649
    %v665 = vadd.f32 %v664, %v650
    %v666 = vadd.f32 %v665, %v651
    %v667 = vrot.slane %v666, 4
    %v668 = vadd.f32 %v666, %v667
    %v669 = vrot.slane %v668, 2
    %v670 = vadd.f32 %v668, %v669
    %v671 = vrot.slane %v670, 1
    %v672 = vadd.f32 %v670, %v671
    %vm673 = vcmp.eq.s32.totalorder %v39, 4
    %v674 = vsel %vm673, %v672, %v547
    %v675 = vlaneseq
    %v676 = vshrl.u32 %v675, 7
    %v677 = vsub.s32 5, %v676
    %v678 = vrot.slane %v27, %v677
    %679 = vxpose.xlu0.b32.start [1/16] %v678, 128
    %680 = vxpose.xlu0.b32.cont [2/16] %v678, 128
    %681 = vxpose.xlu0.b32.cont [3/16] %v678, 128
    %682 = vxpose.xlu0.b32.cont [4/16] %v678, 128
    %683 = vxpose.xlu0.b32.cont [5/16] %v678, 128
    %684 = vxpose.xlu0.b32.cont [6/16] %v678, 128
    %685 = vxpose.xlu0.b32.cont [7/16] %v678, 128
    %686 = vxpose.xlu0.b32.cont [8/16] %v678, 128
    %687 = vxpose.xlu0.b32.cont [9/16] %v678, 128
    %688 = vxpose.xlu0.b32.cont [10/16] %v678, 128
    %689 = vxpose.xlu0.b32.cont [11/16] %v678, 128
    %690 = vxpose.xlu0.b32.cont [12/16] %v678, 128
    %691 = vxpose.xlu0.b32.cont [13/16] %v678, 128
    %692 = vxpose.xlu0.b32.cont [14/16] %v678, 128
    %693 = vxpose.xlu0.b32.cont [15/16] %v678, 128
    %694 = vxpose.xlu0.b32.end [16/16] %v678, 128
    %v695 = vpop.trf.xlu0
    %v696 = vpop.trf.xlu0
    %v697 = vpop.trf.xlu0
    %v698 = vpop.trf.xlu0
    %v699 = vpop.trf.xlu0
    %v700 = vpop.trf.xlu0
    %v701 = vpop.trf.xlu0
    %v702 = vpop.trf.xlu0
    %v703 = vpop.trf.xlu0
    %v704 = vpop.trf.xlu0
    %v705 = vpop.trf.xlu0
    %v706 = vpop.trf.xlu0
    %v707 = vpop.trf.xlu0
    %v708 = vpop.trf.xlu0
    %v709 = vpop.trf.xlu0
    %v710 = vpop.trf.xlu0
    %v711 = vlaneseq
    %v712 = vshrl.u32 %v711, 7
    %v713 = vsub.s32 5, %v712
    %v714 = vrot.slane %v37, %v713
    %715 = vxpose.xlu0.b32.start [1/16] %v714, 128
    %716 = vxpose.xlu0.b32.cont [2/16] %v714, 128
    %717 = vxpose.xlu0.b32.cont [3/16] %v714, 128
    %718 = vxpose.xlu0.b32.cont [4/16] %v714, 128
    %719 = vxpose.xlu0.b32.cont [5/16] %v714, 128
    %720 = vxpose.xlu0.b32.cont [6/16] %v714, 128
    %721 = vxpose.xlu0.b32.cont [7/16] %v714, 128
    %722 = vxpose.xlu0.b32.cont [8/16] %v714, 128
    %723 = vxpose.xlu0.b32.cont [9/16] %v714, 128
    %724 = vxpose.xlu0.b32.cont [10/16] %v714, 128
    %725 = vxpose.xlu0.b32.cont [11/16] %v714, 128
    %726 = vxpose.xlu0.b32.cont [12/16] %v714, 128
    %727 = vxpose.xlu0.b32.cont [13/16] %v714, 128
    %728 = vxpose.xlu0.b32.cont [14/16] %v714, 128
    %729 = vxpose.xlu0.b32.cont [15/16] %v714, 128
    %730 = vxpose.xlu0.b32.end [16/16] %v714, 128
    %v731 = vpop.trf.xlu0
    %v732 = vpop.trf.xlu0
    %v733 = vpop.trf.xlu0
    %v734 = vpop.trf.xlu0
    %v735 = vpop.trf.xlu0
    %v736 = vpop.trf.xlu0
    %v737 = vpop.trf.xlu0
    %v738 = vpop.trf.xlu0
    %v739 = vpop.trf.xlu0
    %v740 = vpop.trf.xlu0
    %v741 = vpop.trf.xlu0
    %v742 = vpop.trf.xlu0
    %v743 = vpop.trf.xlu0
    %v744 = vpop.trf.xlu0
    %v745 = vpop.trf.xlu0
    %v746 = vpop.trf.xlu0
    %vm747 = vcmp.ge.f32.partialorder %v695, %v678
    %vm748 = vcmp.ge.f32.partialorder %v696, %v678
    %vm749 = vcmp.ge.f32.partialorder %v697, %v678
    %vm750 = vcmp.ge.f32.partialorder %v698, %v678
    %vm751 = vcmp.ge.f32.partialorder %v699, %v678
    %vm752 = vcmp.ge.f32.partialorder %v700, %v678
    %vm753 = vcmp.ge.f32.partialorder %v701, %v678
    %vm754 = vcmp.ge.f32.partialorder %v702, %v678
    %vm755 = vcmp.ge.f32.partialorder %v703, %v678
    %vm756 = vcmp.ge.f32.partialorder %v704, %v678
    %vm757 = vcmp.ge.f32.partialorder %v705, %v678
    %vm758 = vcmp.ge.f32.partialorder %v706, %v678
    %vm759 = vcmp.ge.f32.partialorder %v707, %v678
    %vm760 = vcmp.ge.f32.partialorder %v708, %v678
    %vm761 = vcmp.ge.f32.partialorder %v709, %v678
    %vm762 = vcmp.ge.f32.partialorder %v710, %v678
    %v763 = vsel %vm747, %v731, 0.0
    %v764 = vsel %vm748, %v732, 0.0
    %v765 = vsel %vm749, %v733, 0.0
    %v766 = vsel %vm750, %v734, 0.0
    %v767 = vsel %vm751, %v735, 0.0
    %v768 = vsel %vm752, %v736, 0.0
    %v769 = vsel %vm753, %v737, 0.0
    %v770 = vsel %vm754, %v738, 0.0
    %v771 = vsel %vm755, %v739, 0.0
    %v772 = vsel %vm756, %v740, 0.0
    %v773 = vsel %vm757, %v741, 0.0
    %v774 = vsel %vm758, %v742, 0.0
    %v775 = vsel %vm759, %v743, 0.0
    %v776 = vsel %vm760, %v744, 0.0
    %v777 = vsel %vm761, %v745, 0.0
    %v778 = vsel %vm762, %v746, 0.0
    %v779 = vadd.f32 %v763, %v764
    %v780 = vadd.f32 %v779, %v765
    %v781 = vadd.f32 %v780, %v766
    %v782 = vadd.f32 %v781, %v767
    %v783 = vadd.f32 %v782, %v768
    %v784 = vadd.f32 %v783, %v769
    %v785 = vadd.f32 %v784, %v770
    %v786 = vadd.f32 %v785, %v771
    %v787 = vadd.f32 %v786, %v772
    %v788 = vadd.f32 %v787, %v773
    %v789 = vadd.f32 %v788, %v774
    %v790 = vadd.f32 %v789, %v775
    %v791 = vadd.f32 %v790, %v776
    %v792 = vadd.f32 %v791, %v777
    %v793 = vadd.f32 %v792, %v778
    %v794 = vrot.slane %v793, 4
    %v795 = vadd.f32 %v793, %v794
    %v796 = vrot.slane %v795, 2
    %v797 = vadd.f32 %v795, %v796
    %v798 = vrot.slane %v797, 1
    %v799 = vadd.f32 %v797, %v798
    %vm800 = vcmp.eq.s32.totalorder %v39, 5
    %v801 = vsel %vm800, %v799, %v674
    %v802 = vlaneseq
    %v803 = vshrl.u32 %v802, 7
    %v804 = vsub.s32 6, %v803
    %v805 = vrot.slane %v27, %v804
    %806 = vxpose.xlu0.b32.start [1/16] %v805, 128
    %807 = vxpose.xlu0.b32.cont [2/16] %v805, 128
    %808 = vxpose.xlu0.b32.cont [3/16] %v805, 128
    %809 = vxpose.xlu0.b32.cont [4/16] %v805, 128
    %810 = vxpose.xlu0.b32.cont [5/16] %v805, 128
    %811 = vxpose.xlu0.b32.cont [6/16] %v805, 128
    %812 = vxpose.xlu0.b32.cont [7/16] %v805, 128
    %813 = vxpose.xlu0.b32.cont [8/16] %v805, 128
    %814 = vxpose.xlu0.b32.cont [9/16] %v805, 128
    %815 = vxpose.xlu0.b32.cont [10/16] %v805, 128
    %816 = vxpose.xlu0.b32.cont [11/16] %v805, 128
    %817 = vxpose.xlu0.b32.cont [12/16] %v805, 128
    %818 = vxpose.xlu0.b32.cont [13/16] %v805, 128
    %819 = vxpose.xlu0.b32.cont [14/16] %v805, 128
    %820 = vxpose.xlu0.b32.cont [15/16] %v805, 128
    %821 = vxpose.xlu0.b32.end [16/16] %v805, 128
    %v822 = vpop.trf.xlu0
    %v823 = vpop.trf.xlu0
    %v824 = vpop.trf.xlu0
    %v825 = vpop.trf.xlu0
    %v826 = vpop.trf.xlu0
    %v827 = vpop.trf.xlu0
    %v828 = vpop.trf.xlu0
    %v829 = vpop.trf.xlu0
    %v830 = vpop.trf.xlu0
    %v831 = vpop.trf.xlu0
    %v832 = vpop.trf.xlu0
    %v833 = vpop.trf.xlu0
    %v834 = vpop.trf.xlu0
    %v835 = vpop.trf.xlu0
    %v836 = vpop.trf.xlu0
    %v837 = vpop.trf.xlu0
    %v838 = vlaneseq
    %v839 = vshrl.u32 %v838, 7
    %v840 = vsub.s32 6, %v839
    %v841 = vrot.slane %v37, %v840
    %842 = vxpose.xlu0.b32.start [1/16] %v841, 128
    %843 = vxpose.xlu0.b32.cont [2/16] %v841, 128
    %844 = vxpose.xlu0.b32.cont [3/16] %v841, 128
    %845 = vxpose.xlu0.b32.cont [4/16] %v841, 128
    %846 = vxpose.xlu0.b32.cont [5/16] %v841, 128
    %847 = vxpose.xlu0.b32.cont [6/16] %v841, 128
    %848 = vxpose.xlu0.b32.cont [7/16] %v841, 128
    %849 = vxpose.xlu0.b32.cont [8/16] %v841, 128
    %850 = vxpose.xlu0.b32.cont [9/16] %v841, 128
    %851 = vxpose.xlu0.b32.cont [10/16] %v841, 128
    %852 = vxpose.xlu0.b32.cont [11/16] %v841, 128
    %853 = vxpose.xlu0.b32.cont [12/16] %v841, 128
    %854 = vxpose.xlu0.b32.cont [13/16] %v841, 128
    %855 = vxpose.xlu0.b32.cont [14/16] %v841, 128
    %856 = vxpose.xlu0.b32.cont [15/16] %v841, 128
    %857 = vxpose.xlu0.b32.end [16/16] %v841, 128
    %v858 = vpop.trf.xlu0
    %v859 = vpop.trf.xlu0
    %v860 = vpop.trf.xlu0
    %v861 = vpop.trf.xlu0
    %v862 = vpop.trf.xlu0
    %v863 = vpop.trf.xlu0
    %v864 = vpop.trf.xlu0
    %v865 = vpop.trf.xlu0
    %v866 = vpop.trf.xlu0
    %v867 = vpop.trf.xlu0
    %v868 = vpop.trf.xlu0
    %v869 = vpop.trf.xlu0
    %v870 = vpop.trf.xlu0
    %v871 = vpop.trf.xlu0
    %v872 = vpop.trf.xlu0
    %v873 = vpop.trf.xlu0
    %vm874 = vcmp.ge.f32.partialorder %v822, %v805
    %vm875 = vcmp.ge.f32.partialorder %v823, %v805
    %vm876 = vcmp.ge.f32.partialorder %v824, %v805
    %vm877 = vcmp.ge.f32.partialorder %v825, %v805
    %vm878 = vcmp.ge.f32.partialorder %v826, %v805
    %vm879 = vcmp.ge.f32.partialorder %v827, %v805
    %vm880 = vcmp.ge.f32.partialorder %v828, %v805
    %vm881 = vcmp.ge.f32.partialorder %v829, %v805
    %vm882 = vcmp.ge.f32.partialorder %v830, %v805
    %vm883 = vcmp.ge.f32.partialorder %v831, %v805
    %vm884 = vcmp.ge.f32.partialorder %v832, %v805
    %vm885 = vcmp.ge.f32.partialorder %v833, %v805
    %vm886 = vcmp.ge.f32.partialorder %v834, %v805
    %vm887 = vcmp.ge.f32.partialorder %v835, %v805
    %vm888 = vcmp.ge.f32.partialorder %v836, %v805
    %vm889 = vcmp.ge.f32.partialorder %v837, %v805
    %v890 = vsel %vm874, %v858, 0.0
    %v891 = vsel %vm875, %v859, 0.0
    %v892 = vsel %vm876, %v860, 0.0
    %v893 = vsel %vm877, %v861, 0.0
    %v894 = vsel %vm878, %v862, 0.0
    %v895 = vsel %vm879, %v863, 0.0
    %v896 = vsel %vm880, %v864, 0.0
    %v897 = vsel %vm881, %v865, 0.0
    %v898 = vsel %vm882, %v866, 0.0
    %v899 = vsel %vm883, %v867, 0.0
    %v900 = vsel %vm884, %v868, 0.0
    %v901 = vsel %vm885, %v869, 0.0
    %v902 = vsel %vm886, %v870, 0.0
    %v903 = vsel %vm887, %v871, 0.0
    %v904 = vsel %vm888, %v872, 0.0
    %v905 = vsel %vm889, %v873, 0.0
    %v906 = vadd.f32 %v890, %v891
    %v907 = vadd.f32 %v906, %v892
    %v908 = vadd.f32 %v907, %v893
    %v909 = vadd.f32 %v908, %v894
    %v910 = vadd.f32 %v909, %v895
    %v911 = vadd.f32 %v910, %v896
    %v912 = vadd.f32 %v911, %v897
    %v913 = vadd.f32 %v912, %v898
    %v914 = vadd.f32 %v913, %v899
    %v915 = vadd.f32 %v914, %v900
    %v916 = vadd.f32 %v915, %v901
    %v917 = vadd.f32 %v916, %v902
    %v918 = vadd.f32 %v917, %v903
    %v919 = vadd.f32 %v918, %v904
    %v920 = vadd.f32 %v919, %v905
    %v921 = vrot.slane %v920, 4
    %v922 = vadd.f32 %v920, %v921
    %v923 = vrot.slane %v922, 2
    %v924 = vadd.f32 %v922, %v923
    %v925 = vrot.slane %v924, 1
    %v926 = vadd.f32 %v924, %v925
    %vm927 = vcmp.eq.s32.totalorder %v39, 6
    %v928 = vsel %vm927, %v926, %v801
    %v929 = vlaneseq
    %v930 = vshrl.u32 %v929, 7
    %v931 = vsub.s32 7, %v930
    %v932 = vrot.slane %v27, %v931
    %933 = vxpose.xlu0.b32.start [1/16] %v932, 128
    %934 = vxpose.xlu0.b32.cont [2/16] %v932, 128
    %935 = vxpose.xlu0.b32.cont [3/16] %v932, 128
    %936 = vxpose.xlu0.b32.cont [4/16] %v932, 128
    %937 = vxpose.xlu0.b32.cont [5/16] %v932, 128
    %938 = vxpose.xlu0.b32.cont [6/16] %v932, 128
    %939 = vxpose.xlu0.b32.cont [7/16] %v932, 128
    %940 = vxpose.xlu0.b32.cont [8/16] %v932, 128
    %941 = vxpose.xlu0.b32.cont [9/16] %v932, 128
    %942 = vxpose.xlu0.b32.cont [10/16] %v932, 128
    %943 = vxpose.xlu0.b32.cont [11/16] %v932, 128
    %944 = vxpose.xlu0.b32.cont [12/16] %v932, 128
    %945 = vxpose.xlu0.b32.cont [13/16] %v932, 128
    %946 = vxpose.xlu0.b32.cont [14/16] %v932, 128
    %947 = vxpose.xlu0.b32.cont [15/16] %v932, 128
    %948 = vxpose.xlu0.b32.end [16/16] %v932, 128
    %v949 = vpop.trf.xlu0
    %v950 = vpop.trf.xlu0
    %v951 = vpop.trf.xlu0
    %v952 = vpop.trf.xlu0
    %v953 = vpop.trf.xlu0
    %v954 = vpop.trf.xlu0
    %v955 = vpop.trf.xlu0
    %v956 = vpop.trf.xlu0
    %v957 = vpop.trf.xlu0
    %v958 = vpop.trf.xlu0
    %v959 = vpop.trf.xlu0
    %v960 = vpop.trf.xlu0
    %v961 = vpop.trf.xlu0
    %v962 = vpop.trf.xlu0
    %v963 = vpop.trf.xlu0
    %v964 = vpop.trf.xlu0
    %v965 = vlaneseq
    %v966 = vshrl.u32 %v965, 7
    %v967 = vsub.s32 7, %v966
    %v968 = vrot.slane %v37, %v967
    %969 = vxpose.xlu0.b32.start [1/16] %v968, 128
    %970 = vxpose.xlu0.b32.cont [2/16] %v968, 128
    %971 = vxpose.xlu0.b32.cont [3/16] %v968, 128
    %972 = vxpose.xlu0.b32.cont [4/16] %v968, 128
    %973 = vxpose.xlu0.b32.cont [5/16] %v968, 128
    %974 = vxpose.xlu0.b32.cont [6/16] %v968, 128
    %975 = vxpose.xlu0.b32.cont [7/16] %v968, 128
    %976 = vxpose.xlu0.b32.cont [8/16] %v968, 128
    %977 = vxpose.xlu0.b32.cont [9/16] %v968, 128
    %978 = vxpose.xlu0.b32.cont [10/16] %v968, 128
    %979 = vxpose.xlu0.b32.cont [11/16] %v968, 128
    %980 = vxpose.xlu0.b32.cont [12/16] %v968, 128
    %981 = vxpose.xlu0.b32.cont [13/16] %v968, 128
    %982 = vxpose.xlu0.b32.cont [14/16] %v968, 128
    %983 = vxpose.xlu0.b32.cont [15/16] %v968, 128
    %984 = vxpose.xlu0.b32.end [16/16] %v968, 128
    %v985 = vpop.trf.xlu0
    %v986 = vpop.trf.xlu0
    %v987 = vpop.trf.xlu0
    %v988 = vpop.trf.xlu0
    %v989 = vpop.trf.xlu0
    %v990 = vpop.trf.xlu0
    %v991 = vpop.trf.xlu0
    %v992 = vpop.trf.xlu0
    %v993 = vpop.trf.xlu0
    %v994 = vpop.trf.xlu0
    %v995 = vpop.trf.xlu0
    %v996 = vpop.trf.xlu0
    %v997 = vpop.trf.xlu0
    %v998 = vpop.trf.xlu0
    %v999 = vpop.trf.xlu0
    %v1000 = vpop.trf.xlu0
    %vm1001 = vcmp.ge.f32.partialorder %v949, %v932
    %vm1002 = vcmp.ge.f32.partialorder %v950, %v932
    %vm1003 = vcmp.ge.f32.partialorder %v951, %v932
    %vm1004 = vcmp.ge.f32.partialorder %v952, %v932
    %vm1005 = vcmp.ge.f32.partialorder %v953, %v932
    %vm1006 = vcmp.ge.f32.partialorder %v954, %v932
    %vm1007 = vcmp.ge.f32.partialorder %v955, %v932
    %vm1008 = vcmp.ge.f32.partialorder %v956, %v932
    %vm1009 = vcmp.ge.f32.partialorder %v957, %v932
    %vm1010 = vcmp.ge.f32.partialorder %v958, %v932
    %vm1011 = vcmp.ge.f32.partialorder %v959, %v932
    %vm1012 = vcmp.ge.f32.partialorder %v960, %v932
    %vm1013 = vcmp.ge.f32.partialorder %v961, %v932
    %vm1014 = vcmp.ge.f32.partialorder %v962, %v932
    %vm1015 = vcmp.ge.f32.partialorder %v963, %v932
    %vm1016 = vcmp.ge.f32.partialorder %v964, %v932
    %v1017 = vsel %vm1001, %v985, 0.0
    %v1018 = vsel %vm1002, %v986, 0.0
    %v1019 = vsel %vm1003, %v987, 0.0
    %v1020 = vsel %vm1004, %v988, 0.0
    %v1021 = vsel %vm1005, %v989, 0.0
    %v1022 = vsel %vm1006, %v990, 0.0
    %v1023 = vsel %vm1007, %v991, 0.0
    %v1024 = vsel %vm1008, %v992, 0.0
    %v1025 = vsel %vm1009, %v993, 0.0
    %v1026 = vsel %vm1010, %v994, 0.0
    %v1027 = vsel %vm1011, %v995, 0.0
    %v1028 = vsel %vm1012, %v996, 0.0
    %v1029 = vsel %vm1013, %v997, 0.0
    %v1030 = vsel %vm1014, %v998, 0.0
    %v1031 = vsel %vm1015, %v999, 0.0
    %v1032 = vsel %vm1016, %v1000, 0.0
    %v1033 = vadd.f32 %v1017, %v1018
    %v1034 = vadd.f32 %v1033, %v1019
    %v1035 = vadd.f32 %v1034, %v1020
    %v1036 = vadd.f32 %v1035, %v1021
    %v1037 = vadd.f32 %v1036, %v1022
    %v1038 = vadd.f32 %v1037, %v1023
    %v1039 = vadd.f32 %v1038, %v1024
    %v1040 = vadd.f32 %v1039, %v1025
    %v1041 = vadd.f32 %v1040, %v1026
    %v1042 = vadd.f32 %v1041, %v1027
    %v1043 = vadd.f32 %v1042, %v1028
    %v1044 = vadd.f32 %v1043, %v1029
    %v1045 = vadd.f32 %v1044, %v1030
    %v1046 = vadd.f32 %v1045, %v1031
    %v1047 = vadd.f32 %v1046, %v1032
    %v1048 = vrot.slane %v1047, 4
    %v1049 = vadd.f32 %v1047, %v1048
    %v1050 = vrot.slane %v1049, 2
    %v1051 = vadd.f32 %v1049, %v1050
    %v1052 = vrot.slane %v1051, 1
    %v1053 = vadd.f32 %v1051, %v1052
    %vm1054 = vcmp.eq.s32.totalorder %v39, 7
    %v1055 = vsel %vm1054, %v1053, %v928
    %v1056 = vsel %vm30, %v1055, 1.0
    %v1057 = vlog2.pop %v1056
    %v1058 = vmul.f32 %v1057, 0.6931472
    %v1059 = vadd.f32 %v1058, %v33
    %vm1060 = vcmp.gt.f32.partialorder %v25, 0.0
    %v1061 = vsub.f32 %v23, %v1059
    %v1062 = vsel %vm1060, %v1061, 0.0
    %v1063 = vsel %vm30, %v25, 0.0
    %1064 = vadd.xlane.f32.xlu0 %v1063
    %v1065 = vpop.xlane.xlu0 %1064
    %1066 = vadd.xlane.f32.xlu0 %v1062
    %v1067 = vpop.xlane.xlu0 %1066
    %vm1068 = vcmp.gt.f32.partialorder %v1065, 0.0
    %v1069 = vsub.f32 0.0, %v1067
    %v1070 = vmax.f32 %v1065, 1.0
    %v1071 = vrcp.pop %v1070
    %v1072 = vmul.f32 %v1069, %v1071
    %v1073 = vsel %vm1068, %v1072, 0.0
    %1074 = vst [vmem:[#allocation5] sm:$0xff] %v1073
    // Predicated region
    $region10: #{tpu_custom_call.1} parent=1 // pred_check
      _
    $region11: #{tpu_custom_call.1} parent=1 // pred_check_branch
      %1076 = sbr.rel (0) target = $region13
    $region12: #{tpu_custom_call.1} parent=1 // pred_region
      %s1078 = ssub.s32 128, 128
      %1079 = vsyncadd [#allocation4], %s1078
      %s1081 = sshll.u32 [#allocation5], 4
      %s1082 = int_to_ptr.vmem [resolvable:$true] %s1081
      %1084 = dma.vmem_to_hbm [thread:$0]  %s1082, 128, %s1, [#allocation4]
    $region13: #{tpu_custom_call.1} parent=1 // pred_fallthru
      _
    // Predicated region
    $region14: #{tpu_custom_call.1} parent=1 // pred_check
      _
    $region15: #{tpu_custom_call.1} parent=1 // pred_check_branch
      %1086 = sbr.rel (0) target = $region17
    $region16: #{tpu_custom_call.1} parent=1 // pred_region
      %1087 = dma.done [#allocation4], 128
    $region17: #{tpu_custom_call.1} parent=1 // pred_fallthru
      _
    %1088 = vsyncpa [#allocation3], 1
    %1089 = vsyncpa [#allocation4], 1

</llo_original>
